<compile_context>
chip_gen: v5e
topology: v5e:2x2
jax: 0.10.0
libtpu: 0.0.40
codegen_flags: <defaults>
</compile_context>

<pallas_src>
import functools

import jax
import jax.numpy as jnp
from jax.experimental import pallas as pl
from jax.experimental.pallas import tpu as pltpu


def _lora_qkv_kernel(x_ref, wp_ref, bp_ref, wa_ref, wb_ref, o_ref,
                     acc_ref, a_ref):
    # x_ref:  (tm, tk)      token tile x K-slice
    # wp_ref: (tk, tn)      proj weight tile (transposed layout: in x out)
    # bp_ref: (1, tn)       proj bias tile
    # wa_ref: (tk, r_pad)   LoRA A tile (transposed layout)
    # wb_ref: (r_pad, tn)   LoRA B tile (transposed layout)
    # o_ref:  (tm, tn)      output tile (resident across the K axis)
    # acc_ref: (tm, tn) f32 accumulator for the base projection
    # a_ref:   (tm, r_pad) f32 accumulator for the LoRA intermediate
    k = pl.program_id(2)
    nk = pl.num_programs(2)

    @pl.when(k == 0)
    def _init():
        acc_ref[...] = jnp.zeros_like(acc_ref)
        a_ref[...] = jnp.zeros_like(a_ref)

    x = x_ref[...]
    acc_ref[...] += jnp.dot(x, wp_ref[...], preferred_element_type=jnp.float32)
    a_ref[...] += jnp.dot(x, wa_ref[...], preferred_element_type=jnp.float32)

    @pl.when(k == nk - 1)
    def _finalize():
        # LoRA intermediate kept in f32 (no precision loss on the low-rank path).
        lora = jnp.dot(a_ref[...], wb_ref[...].astype(jnp.float32),
                       preferred_element_type=jnp.float32)
        o_ref[...] = (acc_ref[...] + lora + bp_ref[...]).astype(o_ref.dtype)


def _round_up(a, b):
    return ((a + b - 1) // b) * b


@functools.partial(jax.jit, static_argnames=("tm", "tn", "tk"))
def lora_qkv_proj(x, w_proj, b_proj, w_a, w_b, *, tm=256, tn=512, tk=512):
    """y = x @ w_proj^T + b_proj + (x @ w_a^T) @ w_b^T, fused in one kernel.

    x:      (B, S, D)
    w_proj: (D_out, D)   (PyTorch Linear convention)
    b_proj: (D_out,)
    w_a:    (r, D)
    w_b:    (D_out, r)
    """
    B, S, D = x.shape
    D_out, D_in = w_proj.shape
    assert D_in == D
    r = w_a.shape[0]
    M = B * S

    # Clamp tiles to the (padded) problem dims so small shapes don't over-pad.
    tm_ = min(tm, _round_up(M, 8))
    tn_ = min(tn, _round_up(D_out, 128))
    tk_ = min(tk, _round_up(D, 128))
    r_pad = _round_up(r, 128)

    Mp = _round_up(M, tm_)
    Np = _round_up(D_out, tn_)
    Kp = _round_up(D, tk_)

    # Zero-pad everything to tile multiples (zeros contribute nothing to the
    # matmuls; padded output rows/cols are sliced off below).
    x2 = jnp.pad(x.reshape(M, D), ((0, Mp - M), (0, Kp - D)))
    wp_t = jnp.pad(w_proj.T, ((0, Kp - D), (0, Np - D_out)))          # (Kp, Np)
    bp = jnp.pad(b_proj.reshape(1, D_out), ((0, 0), (0, Np - D_out)))  # (1, Np)
    wa_t = jnp.pad(w_a.T, ((0, Kp - D), (0, r_pad - r)))               # (Kp, r_pad)
    wb_t = jnp.pad(w_b.T, ((0, r_pad - r), (0, Np - D_out)))           # (r_pad, Np)

    num_n = Np // tn_
    num_m = Mp // tm_
    num_k = Kp // tk_

    # Explicit VMEM budget: double-buffered input/output tiles + f32 scratch,
    # x2 headroom, capped so it is valid on v7x (64 MiB physical VMEM).
    in_isz = max(x.dtype.itemsize, w_proj.dtype.itemsize)
    est = 2 * (tm_ * tk_ + tk_ * tn_ + tk_ * r_pad + r_pad * tn_ + tn_) * in_isz
    est += 2 * tm_ * tn_ * x.dtype.itemsize
    est += (tm_ * tn_ + tm_ * r_pad) * 4
    vmem_limit = int(min(max(2 * est, 8 << 20), 48 << 20))

    out = pl.pallas_call(
        _lora_qkv_kernel,
        out_shape=jax.ShapeDtypeStruct((Mp, Np), x.dtype),
        grid_spec=pltpu.PrefetchScalarGridSpec(
            num_scalar_prefetch=0,
            grid=(num_n, num_m, num_k),
            in_specs=[
                pl.BlockSpec((tm_, tk_), lambda n, m, k: (m, k)),    # x tile
                pl.BlockSpec((tk_, tn_), lambda n, m, k: (k, n)),    # proj W
                pl.BlockSpec((1, tn_), lambda n, m, k: (0, n)),      # proj bias
                pl.BlockSpec((tk_, r_pad), lambda n, m, k: (k, 0)),  # LoRA A
                pl.BlockSpec((r_pad, tn_), lambda n, m, k: (0, n)),  # LoRA B
            ],
            out_specs=pl.BlockSpec((tm_, tn_), lambda n, m, k: (m, n)),
            scratch_shapes=[
                pltpu.VMEM((tm_, tn_), jnp.float32),   # base-proj accumulator
                pltpu.VMEM((tm_, r_pad), jnp.float32),  # LoRA intermediate acc
            ],
        ),
        compiler_params=pltpu.CompilerParams(
            dimension_semantics=("parallel", "parallel", "arbitrary"),
            vmem_limit_bytes=vmem_limit,
        ),
    )(x2, wp_t, bp, wa_t, wb_t)

    return out[:M, :D_out].reshape(B, S, D_out)


if __name__ == "__main__":
    # Small shapes consistent with the module: batch=2, seq=8, hidden=32, rank=4.
    B, S, D, R = 2, 8, 32, 4
    key = jax.random.PRNGKey(0)
    kx, kp, kb, ka, kbb = jax.random.split(key, 5)

    x = jax.random.normal(kx, (B, S, D), dtype=jnp.float32)
    # PyTorch Linear weight shapes: (out_features, in_features).
    w_proj = jax.random.normal(kp, (D, D), dtype=jnp.float32) * 0.05
    b_proj = jax.random.normal(kb, (D,), dtype=jnp.float32) * 0.01
    w_a = jax.random.normal(ka, (R, D), dtype=jnp.float32) * 0.05
    w_b = jax.random.normal(kbb, (D, R), dtype=jnp.float32) * 0.05

    y = jax.block_until_ready(lora_qkv_proj(x, w_proj, b_proj, w_a, w_b))

    # Pure-JAX reference for correctness.
    y_ref = (x @ w_proj.T + b_proj) + ((x @ w_a.T) @ w_b.T)
    assert y.shape == (B, S, D)
    assert jnp.allclose(y, y_ref, atol=1e-4, rtol=1e-4), "mismatch vs reference"

    print("KERNEL_OK")
</pallas_src>

<mosaic_0001>
module attributes {stable_mosaic.version = 11 : i64} {
  func.func @_lora_qkv_kernel(%arg0: i32, %arg1: i32, %arg2: i32, %arg3: memref<16x128xf32, #tpu.memory_space<vmem>>, %arg4: memref<128x128xf32, #tpu.memory_space<vmem>>, %arg5: memref<1x128xf32, #tpu.memory_space<vmem>>, %arg6: memref<128x128xf32, #tpu.memory_space<vmem>>, %arg7: memref<128x128xf32, #tpu.memory_space<vmem>>, %arg8: memref<16x128xf32, #tpu.memory_space<vmem>>, %arg9: memref<16x128xf32, #tpu.memory_space<vmem>>, %arg10: memref<16x128xf32, #tpu.memory_space<vmem>>) attributes {dimension_semantics = [#tpu.dimension_semantics<parallel>, #tpu.dimension_semantics<parallel>, #tpu.dimension_semantics<arbitrary>], iteration_bounds = array<i64: 1, 1, 1>, scalar_prefetch = 0 : i64, scratch_operands = 2 : i64, tpu.core_type = #tpu.core_type<tc>, window_params = [{transform_indices = @transform_0, window_bounds = array<i64: 16, 128>}, {transform_indices = @transform_1, window_bounds = array<i64: 128, 128>}, {transform_indices = @transform_2, window_bounds = array<i64: 1, 128>}, {transform_indices = @transform_3, window_bounds = array<i64: 128, 128>}, {transform_indices = @transform_4, window_bounds = array<i64: 128, 128>}, {transform_indices = @transform_5, window_bounds = array<i64: 16, 128>}]} {
    %c0_i32 = arith.constant 0 : i32
    %0 = arith.cmpi eq, %arg2, %c0_i32 : i32
    %1 = arith.extui %0 : i1 to i32
    %c0_i32_0 = arith.constant 0 : i32
    %2 = arith.cmpi ne, %1, %c0_i32_0 : i32
    scf.if %2 {
      %cst_17 = arith.constant 0.000000e+00 : f32
      %17 = vector.broadcast %cst_17 : f32 to vector<16x128xf32>
      %c0_18 = arith.constant 0 : index
      %c0_19 = arith.constant 0 : index
      %18 = vector.load %arg9[%c0_18, %c0_19] : memref<16x128xf32, #tpu.memory_space<vmem>>, vector<16x128xf32>
      tpu.vector_store %arg9[%c0_18, %c0_19], %17 {strides = array<i32>} : memref<16x128xf32, #tpu.memory_space<vmem>>, vector<16x128xf32>,
      %cst_20 = arith.constant 0.000000e+00 : f32
      %19 = vector.broadcast %cst_20 : f32 to vector<16x128xf32>
      %c0_21 = arith.constant 0 : index
      %c0_22 = arith.constant 0 : index
      %20 = vector.load %arg10[%c0_21, %c0_22] : memref<16x128xf32, #tpu.memory_space<vmem>>, vector<16x128xf32>
      tpu.vector_store %arg10[%c0_21, %c0_22], %19 {strides = array<i32>} : memref<16x128xf32, #tpu.memory_space<vmem>>, vector<16x128xf32>,
    } else {
    }
    %c0 = arith.constant 0 : index
    %c0_1 = arith.constant 0 : index
    %3 = vector.load %arg3[%c0, %c0_1] : memref<16x128xf32, #tpu.memory_space<vmem>>, vector<16x128xf32>
    %c0_2 = arith.constant 0 : index
    %c0_3 = arith.constant 0 : index
    %4 = vector.load %arg9[%c0_2, %c0_3] : memref<16x128xf32, #tpu.memory_space<vmem>>, vector<16x128xf32>
    %c0_4 = arith.constant 0 : index
    %c0_5 = arith.constant 0 : index
    %5 = vector.load %arg4[%c0_4, %c0_5] : memref<128x128xf32, #tpu.memory_space<vmem>>, vector<128x128xf32>
    %cst = arith.constant dense<0.000000e+00> : vector<16x128xf32>
    %6 = tpu.matmul %3, %5, %cst {dimension_numbers = #tpu.dot_dimension_numbers<[1], [0], [0], [1], [0, 0, 1, 1], [], []>} : vector<16x128xf32>, vector<128x128xf32>, vector<16x128xf32> -> vector<16x128xf32>
    %7 = arith.addf %4, %6 : vector<16x128xf32>
    %c0_6 = arith.constant 0 : index
    %c0_7 = arith.constant 0 : index
    %8 = vector.load %arg9[%c0_6, %c0_7] : memref<16x128xf32, #tpu.memory_space<vmem>>, vector<16x128xf32>
    tpu.vector_store %arg9[%c0_6, %c0_7], %7 {strides = array<i32>} : memref<16x128xf32, #tpu.memory_space<vmem>>, vector<16x128xf32>,
    %c0_8 = arith.constant 0 : index
    %c0_9 = arith.constant 0 : index
    %9 = vector.load %arg10[%c0_8, %c0_9] : memref<16x128xf32, #tpu.memory_space<vmem>>, vector<16x128xf32>
    %c0_10 = arith.constant 0 : index
    %c0_11 = arith.constant 0 : index
    %10 = vector.load %arg6[%c0_10, %c0_11] : memref<128x128xf32, #tpu.memory_space<vmem>>, vector<128x128xf32>
    %cst_12 = arith.constant dense<0.000000e+00> : vector<16x128xf32>
    %11 = tpu.matmul %3, %10, %cst_12 {dimension_numbers = #tpu.dot_dimension_numbers<[1], [0], [0], [1], [0, 0, 1, 1], [], []>} : vector<16x128xf32>, vector<128x128xf32>, vector<16x128xf32> -> vector<16x128xf32>
    %12 = arith.addf %9, %11 : vector<16x128xf32>
    %c0_13 = arith.constant 0 : index
    %c0_14 = arith.constant 0 : index
    %13 = vector.load %arg10[%c0_13, %c0_14] : memref<16x128xf32, #tpu.memory_space<vmem>>, vector<16x128xf32>
    tpu.vector_store %arg10[%c0_13, %c0_14], %12 {strides = array<i32>} : memref<16x128xf32, #tpu.memory_space<vmem>>, vector<16x128xf32>,
    %c0_i32_15 = arith.constant 0 : i32
    %14 = arith.cmpi eq, %arg2, %c0_i32_15 : i32
    %15 = arith.extui %14 : i1 to i32
    %c0_i32_16 = arith.constant 0 : i32
    %16 = arith.cmpi ne, %15, %c0_i32_16 : i32
    scf.if %16 {
      %c0_17 = arith.constant 0 : index
      %c0_18 = arith.constant 0 : index
      %17 = vector.load %arg10[%c0_17, %c0_18] : memref<16x128xf32, #tpu.memory_space<vmem>>, vector<16x128xf32>
      %c0_19 = arith.constant 0 : index
      %c0_20 = arith.constant 0 : index
      %18 = vector.load %arg7[%c0_19, %c0_20] : memref<128x128xf32, #tpu.memory_space<vmem>>, vector<128x128xf32>
      %cst_21 = arith.constant dense<0.000000e+00> : vector<16x128xf32>
      %19 = tpu.matmul %17, %18, %cst_21 {dimension_numbers = #tpu.dot_dimension_numbers<[1], [0], [0], [1], [0, 0, 1, 1], [], []>} : vector<16x128xf32>, vector<128x128xf32>, vector<16x128xf32> -> vector<16x128xf32>
      %c0_22 = arith.constant 0 : index
      %c0_23 = arith.constant 0 : index
      %20 = vector.load %arg9[%c0_22, %c0_23] : memref<16x128xf32, #tpu.memory_space<vmem>>, vector<16x128xf32>
      %21 = arith.addf %20, %19 : vector<16x128xf32>
      %c0_24 = arith.constant 0 : index
      %c0_25 = arith.constant 0 : index
      %22 = vector.load %arg5[%c0_24, %c0_25] : memref<1x128xf32, #tpu.memory_space<vmem>>, vector<1x128xf32>
      %23 = vector.broadcast %22 : vector<1x128xf32> to vector<16x128xf32>
      %24 = arith.addf %21, %23 : vector<16x128xf32>
      %c0_26 = arith.constant 0 : index
      %c0_27 = arith.constant 0 : index
      %25 = vector.load %arg8[%c0_26, %c0_27] : memref<16x128xf32, #tpu.memory_space<vmem>>, vector<16x128xf32>
      tpu.vector_store %arg8[%c0_26, %c0_27], %24 {strides = array<i32>} : memref<16x128xf32, #tpu.memory_space<vmem>>, vector<16x128xf32>,
    } else {
    }
    return
  }
  func.func @transform_0(%arg0: i32, %arg1: i32, %arg2: i32) -> (i32, i32) {
    %c0_i32 = arith.constant 0 : i32
    return %arg1, %arg2 : i32, i32
  }
  func.func @transform_1(%arg0: i32, %arg1: i32, %arg2: i32) -> (i32, i32) {
    %c0_i32 = arith.constant 0 : i32
    return %arg2, %arg0 : i32, i32
  }
  func.func @transform_2(%arg0: i32, %arg1: i32, %arg2: i32) -> (i32, i32) {
    %c0_i32 = arith.constant 0 : i32
    %c0_i32_0 = arith.constant 0 : i32
    return %c0_i32, %arg0 : i32, i32
  }
  func.func @transform_3(%arg0: i32, %arg1: i32, %arg2: i32) -> (i32, i32) {
    %c0_i32 = arith.constant 0 : i32
    %c0_i32_0 = arith.constant 0 : i32
    return %arg2, %c0_i32 : i32, i32
  }
  func.func @transform_4(%arg0: i32, %arg1: i32, %arg2: i32) -> (i32, i32) {
    %c0_i32 = arith.constant 0 : i32
    %c0_i32_0 = arith.constant 0 : i32
    return %c0_i32, %arg0 : i32, i32
  }
  func.func @transform_5(%arg0: i32, %arg1: i32, %arg2: i32) -> (i32, i32) {
    %c0_i32 = arith.constant 0 : i32
    return %arg1, %arg0 : i32, i32
  }
}

</mosaic_0001>

<llo_original>
// kernel: lora_qkv_proj.1
$region0: #{lora_qkv_proj.1}
  #allocation0 [shape = 'u32[]', space=smem, size = 0x4, offset = 0x4, fixed_abs, tag = 'smem constant byte address 0x4 - core index']
  #allocation1 [shape = 'u32[72,128]{1,0:T(1,128)}', space=vmem, size = 0x9000, scoped, tag = 'internal scratch']
  #allocation2 [shape = 'f32[16,128]{1,0:T(8,128)}', space=vmem, size = 0x2000, scoped, tag = 'scratch operand']
  #allocation3 [shape = 'f32[16,128]{1,0:T(8,128)}', space=vmem, size = 0x2000, scoped, tag = 'scratch operand']
  %s0 = inlined_call_operand.vmem [shape: f32[16,128], index: 0, kind: input, shape index: {}]
  %s1 = inlined_call_operand.vmem [shape: f32[128,128], index: 1, kind: input, shape index: {}]
  %s2 = inlined_call_operand.vmem [shape: f32[1,128], index: 2, kind: input, shape index: {}]
  %s3 = inlined_call_operand.vmem [shape: f32[128,128], index: 3, kind: input, shape index: {}]
  %s4 = inlined_call_operand.vmem [shape: f32[128,128], index: 4, kind: input, shape index: {}]
  %s5 = inlined_call_operand.vmem [shape: f32[16,128], index: 5, kind: output, shape index: {}]
  %s6 = sld [smem:[#allocation0]]
  $region38: #{lora_qkv_proj.1} parent=0
    _
  %s8 = ssub.s32 1, %s6
  %s9 = scalar_select 0, %s8, %s6
  // Predicated region
  $region2: #{lora_qkv_proj.1} parent=0 // pred_check
    _
  $region3: #{lora_qkv_proj.1} parent=0 // pred_check_branch
    %11 = sbr.rel (0) target = $region5
  $region4: #{lora_qkv_proj.1} parent=0 // pred_region
    _
  $region5: #{lora_qkv_proj.1} parent=0 // pred_fallthru
    _
  // Predicated region
  $region6: #{lora_qkv_proj.1} parent=0 // pred_check
    _
  $region7: #{lora_qkv_proj.1} parent=0 // pred_check_branch
    %13 = sbr.rel (0) target = $region9
  $region8: #{lora_qkv_proj.1} parent=0 // pred_region
    _
  $region9: #{lora_qkv_proj.1} parent=0 // pred_fallthru
    _
  // Predicated region
  $region10: #{lora_qkv_proj.1} parent=0 // pred_check
    _
  $region11: #{lora_qkv_proj.1} parent=0 // pred_check_branch
    %15 = sbr.rel (0) target = $region13
  $region12: #{lora_qkv_proj.1} parent=0 // pred_region
    _
  $region13: #{lora_qkv_proj.1} parent=0 // pred_fallthru
    _
  // Predicated region
  $region14: #{lora_qkv_proj.1} parent=0 // pred_check
    _
  $region15: #{lora_qkv_proj.1} parent=0 // pred_check_branch
    %17 = sbr.rel (0) target = $region17
  $region16: #{lora_qkv_proj.1} parent=0 // pred_region
    _
  $region17: #{lora_qkv_proj.1} parent=0 // pred_fallthru
    _
  // Predicated region
  $region18: #{lora_qkv_proj.1} parent=0 // pred_check
    _
  $region19: #{lora_qkv_proj.1} parent=0 // pred_check_branch
    %19 = sbr.rel (0) target = $region21
  $region20: #{lora_qkv_proj.1} parent=0 // pred_region
    _
  $region21: #{lora_qkv_proj.1} parent=0 // pred_fallthru
    _
  %p20 = scmp.eq.s32.totalorder 0, 0
  // Predicated region
  $region22: #{lora_qkv_proj.1} parent=0 // pred_check
    %p21 = pneg %p20
  $region23: #{lora_qkv_proj.1} parent=0 // pred_check_branch
    %23 = sbr.rel (%p21) target = $region25
  $region24: #{lora_qkv_proj.1} parent=0 // pred_region
    %24 = vst [vmem:[#allocation2] sm:$0xff] 0.0
    %25 = vst [vmem:[#allocation2 + $0x8] sm:$0xff] 0.0
    %26 = vst [vmem:[#allocation3] sm:$0xff] 0.0
    %27 = vst [vmem:[#allocation3 + $0x8] sm:$0xff] 0.0
  $region25: #{lora_qkv_proj.1} parent=0 // pred_fallthru
    _
  %v28 = vld [vmem:[%s0] sm:$0xff]
  %v29 = vld [vmem:[%s0 + $0x8] sm:$0xff]
  %v30 = vld [vmem:[#allocation2] sm:$0xff]
  %v31 = vld [vmem:[#allocation2 + $0x8] sm:$0xff]
  %v32 = vld [vmem:[%s1] sm:$0xff]
  %v33 = vld [vmem:[%s1 + $0x8] sm:$0xff]
  %v34 = vld [vmem:[%s1 + $0x10] sm:$0xff]
  %v35 = vld [vmem:[%s1 + $0x18] sm:$0xff]
  %v36 = vld [vmem:[%s1 + $0x20] sm:$0xff]
  %v37 = vld [vmem:[%s1 + $0x28] sm:$0xff]
  %v38 = vld [vmem:[%s1 + $0x30] sm:$0xff]
  %v39 = vld [vmem:[%s1 + $0x38] sm:$0xff]
  %v40 = vld [vmem:[%s1 + $0x40] sm:$0xff]
  %v41 = vld [vmem:[%s1 + $0x48] sm:$0xff]
  %v42 = vld [vmem:[%s1 + $0x50] sm:$0xff]
  %v43 = vld [vmem:[%s1 + $0x58] sm:$0xff]
  %v44 = vld [vmem:[%s1 + $0x60] sm:$0xff]
  %v45 = vld [vmem:[%s1 + $0x68] sm:$0xff]
  %v46 = vld [vmem:[%s1 + $0x70] sm:$0xff]
  %v47 = vld [vmem:[%s1 + $0x78] sm:$0xff]
  %48 = vmatpush.msra.mxu0 %v47
  %49 = vmatpush.msra.mxu0 %v46
  %50 = vmatpush.msra.mxu0 %v45
  %51 = vmatpush.msra.mxu0 %v44
  %52 = vmatpush.msra.mxu0 %v43
  %53 = vmatpush.msra.mxu0 %v42
  %54 = vmatpush.msra.mxu0 %v41
  %55 = vmatpush.msra.mxu0 %v40
  %56 = vmatpush.msra.mxu0 %v39
  %57 = vmatpush.msra.mxu0 %v38
  %58 = vmatpush.msra.mxu0 %v37
  %59 = vmatpush.msra.mxu0 %v36
  %60 = vmatpush.msra.mxu0 %v35
  %61 = vmatpush.msra.mxu0 %v34
  %62 = vmatpush.msra.mxu0 %v33
  %63 = vmatpush.msra.mxu0 %v32
  %64 = vmatmul.f32.gmra.mxu0 %v28
  %v65 = vpop.f32.mrf.mxu0
  %v66 = vadd.f32 0.0, %v65
  %67 = vmatmul.f32.gmra.mxu0 %v29
  %v68 = vpop.f32.mrf.mxu0
  %v69 = vadd.f32 0.0, %v68
  %70 = vdwg.mxu0
  %v71 = vadd.f32 %v30, %v66
  %v72 = vadd.f32 %v31, %v69
  %73 = vst [vmem:[#allocation2] sm:$0xff] %v71
  %74 = vst [vmem:[#allocation2 + $0x8] sm:$0xff] %v72
  %v75 = vld [vmem:[#allocation3] sm:$0xff]
  %v76 = vld [vmem:[#allocation3 + $0x8] sm:$0xff]
  %v77 = vld [vmem:[%s3] sm:$0xff]
  %v78 = vld [vmem:[%s3 + $0x8] sm:$0xff]
  %v79 = vld [vmem:[%s3 + $0x10] sm:$0xff]
  %v80 = vld [vmem:[%s3 + $0x18] sm:$0xff]
  %v81 = vld [vmem:[%s3 + $0x20] sm:$0xff]
  %v82 = vld [vmem:[%s3 + $0x28] sm:$0xff]
  %v83 = vld [vmem:[%s3 + $0x30] sm:$0xff]
  %v84 = vld [vmem:[%s3 + $0x38] sm:$0xff]
  %v85 = vld [vmem:[%s3 + $0x40] sm:$0xff]
  %v86 = vld [vmem:[%s3 + $0x48] sm:$0xff]
  %v87 = vld [vmem:[%s3 + $0x50] sm:$0xff]
  %v88 = vld [vmem:[%s3 + $0x58] sm:$0xff]
  %v89 = vld [vmem:[%s3 + $0x60] sm:$0xff]
  %v90 = vld [vmem:[%s3 + $0x68] sm:$0xff]
  %v91 = vld [vmem:[%s3 + $0x70] sm:$0xff]
  %v92 = vld [vmem:[%s3 + $0x78] sm:$0xff]
  %93 = vmatpush.msra.mxu0 %v92
  %94 = vmatpush.msra.mxu0 %v91
  %95 = vmatpush.msra.mxu0 %v90
  %96 = vmatpush.msra.mxu0 %v89
  %97 = vmatpush.msra.mxu0 %v88
  %98 = vmatpush.msra.mxu0 %v87
  %99 = vmatpush.msra.mxu0 %v86
  %100 = vmatpush.msra.mxu0 %v85
  %101 = vmatpush.msra.mxu0 %v84
  %102 = vmatpush.msra.mxu0 %v83
  %103 = vmatpush.msra.mxu0 %v82
  %104 = vmatpush.msra.mxu0 %v81
  %105 = vmatpush.msra.mxu0 %v80
  %106 = vmatpush.msra.mxu0 %v79
  %107 = vmatpush.msra.mxu0 %v78
  %108 = vmatpush.msra.mxu0 %v77
  %109 = vmatmul.f32.gmra.mxu0 %v28
  %v110 = vpop.f32.mrf.mxu0
  %v111 = vadd.f32 0.0, %v110
  %112 = vmatmul.f32.gmra.mxu0 %v29
  %v113 = vpop.f32.mrf.mxu0
  %v114 = vadd.f32 0.0, %v113
  %115 = vdwg.mxu0
  %v116 = vadd.f32 %v75, %v111
  %v117 = vadd.f32 %v76, %v114
  %118 = vst [vmem:[#allocation3] sm:$0xff] %v116
  %119 = vst [vmem:[#allocation3 + $0x8] sm:$0xff] %v117
  // Predicated region
  $region26: #{lora_qkv_proj.1} parent=0 // pred_check
    %p120 = pneg %p20
  $region27: #{lora_qkv_proj.1} parent=0 // pred_check_branch
    %122 = sbr.rel (%p120) target = $region29
  $region28: #{lora_qkv_proj.1} parent=0 // pred_region
    %v123 = vld [vmem:[#allocation3] sm:$0xff]
    %v124 = vld [vmem:[#allocation3 + $0x8] sm:$0xff]
    %v125 = vld [vmem:[%s4] sm:$0xff]
    %v126 = vld [vmem:[%s4 + $0x8] sm:$0xff]
    %v127 = vld [vmem:[%s4 + $0x10] sm:$0xff]
    %v128 = vld [vmem:[%s4 + $0x18] sm:$0xff]
    %v129 = vld [vmem:[%s4 + $0x20] sm:$0xff]
    %v130 = vld [vmem:[%s4 + $0x28] sm:$0xff]
    %v131 = vld [vmem:[%s4 + $0x30] sm:$0xff]
    %v132 = vld [vmem:[%s4 + $0x38] sm:$0xff]
    %v133 = vld [vmem:[%s4 + $0x40] sm:$0xff]
    %v134 = vld [vmem:[%s4 + $0x48] sm:$0xff]
    %v135 = vld [vmem:[%s4 + $0x50] sm:$0xff]
    %v136 = vld [vmem:[%s4 + $0x58] sm:$0xff]
    %v137 = vld [vmem:[%s4 + $0x60] sm:$0xff]
    %v138 = vld [vmem:[%s4 + $0x68] sm:$0xff]
    %v139 = vld [vmem:[%s4 + $0x70] sm:$0xff]
    %v140 = vld [vmem:[%s4 + $0x78] sm:$0xff]
    %141 = vmatpush.msra.mxu0 %v140
    %142 = vmatpush.msra.mxu0 %v139
    %143 = vmatpush.msra.mxu0 %v138
    %144 = vmatpush.msra.mxu0 %v137
    %145 = vmatpush.msra.mxu0 %v136
    %146 = vmatpush.msra.mxu0 %v135
    %147 = vmatpush.msra.mxu0 %v134
    %148 = vmatpush.msra.mxu0 %v133
    %149 = vmatpush.msra.mxu0 %v132
    %150 = vmatpush.msra.mxu0 %v131
    %151 = vmatpush.msra.mxu0 %v130
    %152 = vmatpush.msra.mxu0 %v129
    %153 = vmatpush.msra.mxu0 %v128
    %154 = vmatpush.msra.mxu0 %v127
    %155 = vmatpush.msra.mxu0 %v126
    %156 = vmatpush.msra.mxu0 %v125
    %157 = vmatmul.f32.gmra.mxu0 %v123
    %v158 = vpop.f32.mrf.mxu0
    %v159 = vadd.f32 0.0, %v158
    %160 = vmatmul.f32.gmra.mxu0 %v124
    %v161 = vpop.f32.mrf.mxu0
    %v162 = vadd.f32 0.0, %v161
    %163 = vdwg.mxu0
    %v164 = vld [vmem:[#allocation2] sm:$0xff]
    %v165 = vld [vmem:[#allocation2 + $0x8] sm:$0xff]
    %v166 = vadd.f32 %v164, %v159
    %v167 = vadd.f32 %v165, %v162
    %v168 = vld [vmem:[%s2] sm:$0x1]
    %v170 = vperm.slane %v168, 0
    %v172 = vadd.f32 %v166, %v170
    %v173 = vadd.f32 %v167, %v170
    %174 = vst [vmem:[%s5] sm:$0xff] %v172
    %175 = vst [vmem:[%s5 + $0x8] sm:$0xff] %v173
  $region29: #{lora_qkv_proj.1} parent=0 // pred_fallthru
    _
  // Predicated region
  $region30: #{lora_qkv_proj.1} parent=0 // pred_check
    _
  $region31: #{lora_qkv_proj.1} parent=0 // pred_check_branch
    %177 = sbr.rel (0) target = $region33
  $region32: #{lora_qkv_proj.1} parent=0 // pred_region
    _
  $region33: #{lora_qkv_proj.1} parent=0 // pred_fallthru
    _
  // Predicated region
  $region34: #{lora_qkv_proj.1} parent=0 // pred_check
    _
  $region35: #{lora_qkv_proj.1} parent=0 // pred_check_branch
    %179 = sbr.rel (0) target = $region37
  $region36: #{lora_qkv_proj.1} parent=0 // pred_region
    _
  $region37: #{lora_qkv_proj.1} parent=0 // pred_fallthru
    _

</llo_original>
